<compile_context>
chip_gen: v7x
topology: tpu7x:2x2x1
jax: 0.10.0
libtpu: 0.0.40
codegen_flags: <defaults>
</compile_context>

<pallas_src>
import functools

import jax
import jax.numpy as jnp
from jax.experimental import pallas as pl
from jax.experimental.pallas import tpu as pltpu


def _round_up(x, m):
    return ((x + m - 1) // m) * m


def _choose_block_b(B, C, *, activation_budget_bytes=16 * 1024 * 1024,
                    max_block=32768):
    """Batch-tile width along the lane axis: multiple of 128, VMEM-budgeted."""
    b_pad = _round_up(max(B, 1), 128)
    # Per batch column (f32): double-buffered input + output tiles + logdet row.
    bytes_per_col = 4 * (2 * C + 2 * C + 2)
    tb = activation_budget_bytes // max(bytes_per_col, 1)
    tb = max(128, min(max_block, (tb // 128) * 128))
    tb = min(tb, b_pad)
    # Prefer >= 2 grid steps when the batch allows it: keeps both v7x
    # TensorCores busy and gives BlockSpec pipelining DMA/compute overlap.
    if b_pad // tb < 2 and b_pad >= 256:
        tb = max(128, (b_pad // 2 // 128) * 128)
    return tb


def _affine_coupling_kernel(x_ref, w1_ref, b1_ref, w2_ref, b2_ref,
                            w3_ref, b3_ref, out_ref, logdet_ref,
                            *, parity, half, compute_dtype):
    # (feature, batch) layout: batch is the 128-lane axis of every operand.
    x = x_ref[...]                                   # (C, TB) f32
    first = x[:half, :]
    second = x[half:, :]
    in_a, in_b = (second, first) if parity else (first, second)

    cd = compute_dtype
    # Weights arrive pre-transposed to (out_feat, in_feat) and already in the
    # compute dtype (cast once in the wrapper; they are VMEM-resident across
    # the grid).  Biases are (out_feat, 1) f32 and broadcast across lanes.
    h = jnp.dot(w1_ref[...], in_a.astype(cd),
                preferred_element_type=jnp.float32) + b1_ref[...]
    h = jnp.where(h > 0, h, 0.01 * h)                # LeakyReLU(0.01)
    h = jnp.dot(w2_ref[...], h.astype(cd),
                preferred_element_type=jnp.float32) + b2_ref[...]
    h = jnp.where(h > 0, h, 0.01 * h)
    net = jnp.dot(w3_ref[...], h.astype(cd),
                  preferred_element_type=jnp.float32) + b3_ref[...]

    log_s = net[:half, :]                            # (half, TB)
    t = net[half:, :]
    z = log_s + 2.0
    s = jax.nn.sigmoid(z)
    out_b = (in_b + t) * s

    # Lane-dense (1, TB) logdet row; log_sigmoid(z) == log(sigmoid(z)) but is
    # numerically safe and saves one transcendental per element.
    logdet_ref[...] = jnp.sum(jax.nn.log_sigmoid(z), axis=0, keepdims=True)

    # Single dense full-tile store (no masked partial stores).
    if parity:
        out = jnp.concatenate([out_b, in_a], axis=0)
    else:
        out = jnp.concatenate([in_a, out_b], axis=0)
    out_ref[...] = out.astype(out_ref.dtype)


def affine_coupling_forward(x, params, parity, *, block_b=None,
                            compute_dtype=jnp.bfloat16):
    B, C = x.shape
    half = C // 2
    cd = compute_dtype

    if block_b is None:
        block_b = _choose_block_b(B, C)
    else:
        block_b = max(128, _round_up(block_b, 128))

    num_tiles = pl.cdiv(B, block_b)
    b_total = num_tiles * block_b

    # Layout plumbing: batch onto the lane axis; zero-pad to a whole number of
    # lane-dense tiles (padded columns are computed then sliced away).
    x_t = jnp.transpose(x)                           # (C, B)
    if b_total != B:
        x_t = jnp.pad(x_t, ((0, 0), (0, b_total - B)))

    # Weights: (out_feat, in_feat), cast once to the MXU compute dtype.
    w1 = jnp.transpose(params["w1"]).astype(cd)      # (F, half)
    w2 = jnp.transpose(params["w2"]).astype(cd)      # (F, F)
    w3 = jnp.transpose(params["w3"]).astype(cd)      # (C, F)
    b1 = jnp.transpose(params["b1"]).astype(jnp.float32)   # (F, 1)
    b2 = jnp.transpose(params["b2"]).astype(jnp.float32)   # (F, 1)
    b3 = jnp.transpose(params["b3"]).astype(jnp.float32)   # (C, 1)

    kernel = functools.partial(_affine_coupling_kernel, parity=bool(parity),
                               half=half, compute_dtype=cd)

    def resident(arr):
        # Full-array block, constant index map -> VMEM-resident across grid.
        return pl.BlockSpec(arr.shape, lambda i: (0, 0))

    out_t, logdet_t = pl.pallas_call(
        kernel,
        out_shape=(jax.ShapeDtypeStruct((C, b_total), jnp.float32),
                   jax.ShapeDtypeStruct((1, b_total), jnp.float32)),
        grid=(num_tiles,),
        in_specs=[
            pl.BlockSpec((C, block_b), lambda i: (0, i)),   # x^T batch tile
            resident(w1), resident(b1),
            resident(w2), resident(b2),
            resident(w3), resident(b3),
        ],
        out_specs=(pl.BlockSpec((C, block_b), lambda i: (0, i)),
                   pl.BlockSpec((1, block_b), lambda i: (0, i))),
        compiler_params=pltpu.CompilerParams(
            dimension_semantics=("parallel",),
            vmem_limit_bytes=48 * 1024 * 1024),
    )(x_t, w1, b1, w2, b2, w3, b3)

    out = jnp.transpose(out_t)[:B]                   # (B, C)
    logdet = logdet_t[0, :B]                         # (B,)
    return out, logdet


def init_params(key, C, F):
    """Coupling-net params. torch Linear does x @ W.T + b; stored as (in, out)."""
    k1, k2, k3, kb3 = jax.random.split(key, 4)
    w1 = 0.05 * jax.random.normal(k1, (C // 2, F), jnp.float32)
    b1 = jnp.zeros((1, F), jnp.float32)
    w2 = 0.05 * jax.random.normal(k2, (F, F), jnp.float32)
    b2 = jnp.zeros((1, F), jnp.float32)
    # last Linear keeps torch's default uniform(-1/sqrt(F), 1/sqrt(F)) init:
    bound = 1.0 / float(jnp.sqrt(jnp.float32(F)))
    w3 = jax.random.uniform(k3, (F, C), jnp.float32, -bound, bound)
    b3 = jax.random.uniform(kb3, (1, C), jnp.float32, -bound, bound)
    return dict(w1=w1, b1=b1, w2=w2, b2=b2, w3=w3, b3=b3)


def affine_coupling_reference(x, p, parity):
    """Pure-JAX (f32) reference mirroring the PyTorch forward, for validation."""
    B, C = x.shape
    half = C // 2
    leaky = lambda v: jnp.where(v > 0, v, 0.01 * v)
    in_a, in_b = x[:, :half], x[:, half:]
    if parity:
        in_a, in_b = in_b, in_a
    h = leaky(in_a @ p["w1"] + p["b1"])
    h = leaky(h @ p["w2"] + p["b2"])
    net = h @ p["w3"] + p["b3"]
    log_s, t = net[:, :half], net[:, half:]
    s = jax.nn.sigmoid(log_s + 2.0)
    out_b = (in_b + t) * s
    logdet = jnp.sum(jnp.log(s), axis=1)
    if parity:
        in_a, out_b = out_b, in_a
    return jnp.concatenate([in_a, out_b], axis=1), logdet


if __name__ == "__main__":
    # B deliberately NOT a multiple of 128: exercises the cdiv grid + padding
    # path (2 tiles of 128) with VMEM-resident weights.
    B, C, FILTER = 200, 8, 32

    key = jax.random.PRNGKey(0)
    kx, kp = jax.random.split(key)
    x = jax.random.normal(kx, (B, C), jnp.float32)
    params = init_params(kp, C, FILTER)

    for parity in (0, 1):
        ref_out, ref_ld = affine_coupling_reference(x, params, parity)

        # f32-matmul path: tight check against the reference.
        out32, ld32 = affine_coupling_forward(x, params, parity,
                                              compute_dtype=jnp.float32)
        out32 = jax.block_until_ready(out32)
        ld32 = jax.block_until_ready(ld32)
        assert out32.shape == (B, C) and ld32.shape == (B,)
        assert bool(jnp.allclose(out32, ref_out, atol=1e-4, rtol=1e-4))
        assert bool(jnp.allclose(ld32, ref_ld, atol=1e-4, rtol=1e-4))

    # Default bf16-MXU path: looser tolerance vs the f32 reference.
    PARITY = 1
    ref_out, ref_ld = affine_coupling_reference(x, params, PARITY)
    out_bf, ld_bf = affine_coupling_forward(x, params, PARITY)
    out_bf = jax.block_until_ready(out_bf)
    ld_bf = jax.block_until_ready(ld_bf)
    assert bool(jnp.allclose(out_bf, ref_out, atol=2e-2, rtol=2e-2))
    assert bool(jnp.allclose(ld_bf, ref_ld, atol=2e-2, rtol=2e-2))

    print("KERNEL_OK")
</pallas_src>

<mosaic_0001>
module attributes {stable_mosaic.version = 11 : i64} {
  func.func @_affine_coupling_kernel(%arg0: i32, %arg1: memref<8x128xf32, #tpu.memory_space<vmem>>, %arg2: memref<32x4xf32, #tpu.memory_space<vmem>>, %arg3: memref<32x1xf32, #tpu.memory_space<vmem>>, %arg4: memref<32x32xf32, #tpu.memory_space<vmem>>, %arg5: memref<32x1xf32, #tpu.memory_space<vmem>>, %arg6: memref<8x32xf32, #tpu.memory_space<vmem>>, %arg7: memref<8x1xf32, #tpu.memory_space<vmem>>, %arg8: memref<8x128xf32, #tpu.memory_space<vmem>>, %arg9: memref<1x128xf32, #tpu.memory_space<vmem>>) attributes {dimension_semantics = [#tpu.dimension_semantics<parallel>], iteration_bounds = array<i64: 2>, scalar_prefetch = 0 : i64, scratch_operands = 0 : i64, tpu.core_type = #tpu.core_type<tc>, window_params = [{transform_indices = @transform_0, window_bounds = array<i64: 8, 128>}, {pipeline_mode = #tpu.pipeline_mode<synchronous>, transform_indices = @transform_1, window_bounds = array<i64: 32, 4>}, {pipeline_mode = #tpu.pipeline_mode<synchronous>, transform_indices = @transform_2, window_bounds = array<i64: 32, 1>}, {pipeline_mode = #tpu.pipeline_mode<synchronous>, transform_indices = @transform_3, window_bounds = array<i64: 32, 32>}, {pipeline_mode = #tpu.pipeline_mode<synchronous>, transform_indices = @transform_4, window_bounds = array<i64: 32, 1>}, {pipeline_mode = #tpu.pipeline_mode<synchronous>, transform_indices = @transform_5, window_bounds = array<i64: 8, 32>}, {pipeline_mode = #tpu.pipeline_mode<synchronous>, transform_indices = @transform_6, window_bounds = array<i64: 8, 1>}, {transform_indices = @transform_7, window_bounds = array<i64: 8, 128>}, {transform_indices = @transform_8, window_bounds = array<i64: 1, 128>}]} {
    %c0 = arith.constant 0 : index
    %c0_0 = arith.constant 0 : index
    %0 = vector.load %arg1[%c0, %c0_0] : memref<8x128xf32, #tpu.memory_space<vmem>>, vector<8x128xf32>
    %1 = vector.extract_strided_slice %0 {offsets = [0, 0], sizes = [4, 128], strides = [1, 1]} : vector<8x128xf32> to vector<4x128xf32>
    %2 = vector.extract_strided_slice %0 {offsets = [4, 0], sizes = [4, 128], strides = [1, 1]} : vector<8x128xf32> to vector<4x128xf32>
    %c0_1 = arith.constant 0 : index
    %c0_2 = arith.constant 0 : index
    %3 = vector.load %arg2[%c0_1, %c0_2] : memref<32x4xf32, #tpu.memory_space<vmem>>, vector<32x4xf32>
    %cst = arith.constant dense<0.000000e+00> : vector<32x128xf32>
    %4 = tpu.matmul %3, %1, %cst {dimension_numbers = #tpu.dot_dimension_numbers<[1], [0], [0], [1], [0, 0, 1, 1], [], []>} : vector<32x4xf32>, vector<4x128xf32>, vector<32x128xf32> -> vector<32x128xf32>
    %c0_3 = arith.constant 0 : index
    %c0_4 = arith.constant 0 : index
    %5 = vector.load %arg3[%c0_3, %c0_4] : memref<32x1xf32, #tpu.memory_space<vmem>>, vector<32x1xf32>
    %6 = vector.broadcast %5 : vector<32x1xf32> to vector<32x128xf32>
    %7 = arith.addf %4, %6 : vector<32x128xf32>
    %cst_5 = arith.constant 0.000000e+00 : f32
    %8 = vector.broadcast %cst_5 : f32 to vector<32x128xf32>
    %9 = arith.cmpf ogt, %7, %8 : vector<32x128xf32>
    %cst_6 = arith.constant 0.00999999977 : f32
    %10 = vector.broadcast %cst_6 : f32 to vector<32x128xf32>
    %11 = arith.mulf %10, %7 : vector<32x128xf32>
    %12 = arith.select %9, %7, %11 : vector<32x128xi1>, vector<32x128xf32>
    %c0_7 = arith.constant 0 : index
    %c0_8 = arith.constant 0 : index
    %13 = vector.load %arg4[%c0_7, %c0_8] : memref<32x32xf32, #tpu.memory_space<vmem>>, vector<32x32xf32>
    %cst_9 = arith.constant dense<0.000000e+00> : vector<32x128xf32>
    %14 = tpu.matmul %13, %12, %cst_9 {dimension_numbers = #tpu.dot_dimension_numbers<[1], [0], [0], [1], [0, 0, 1, 1], [], []>} : vector<32x32xf32>, vector<32x128xf32>, vector<32x128xf32> -> vector<32x128xf32>
    %c0_10 = arith.constant 0 : index
    %c0_11 = arith.constant 0 : index
    %15 = vector.load %arg5[%c0_10, %c0_11] : memref<32x1xf32, #tpu.memory_space<vmem>>, vector<32x1xf32>
    %16 = vector.broadcast %15 : vector<32x1xf32> to vector<32x128xf32>
    %17 = arith.addf %14, %16 : vector<32x128xf32>
    %cst_12 = arith.constant 0.000000e+00 : f32
    %18 = vector.broadcast %cst_12 : f32 to vector<32x128xf32>
    %19 = arith.cmpf ogt, %17, %18 : vector<32x128xf32>
    %cst_13 = arith.constant 0.00999999977 : f32
    %20 = vector.broadcast %cst_13 : f32 to vector<32x128xf32>
    %21 = arith.mulf %20, %17 : vector<32x128xf32>
    %22 = arith.select %19, %17, %21 : vector<32x128xi1>, vector<32x128xf32>
    %c0_14 = arith.constant 0 : index
    %c0_15 = arith.constant 0 : index
    %23 = vector.load %arg6[%c0_14, %c0_15] : memref<8x32xf32, #tpu.memory_space<vmem>>, vector<8x32xf32>
    %cst_16 = arith.constant dense<0.000000e+00> : vector<8x128xf32>
    %24 = tpu.matmul %23, %22, %cst_16 {dimension_numbers = #tpu.dot_dimension_numbers<[1], [0], [0], [1], [0, 0, 1, 1], [], []>} : vector<8x32xf32>, vector<32x128xf32>, vector<8x128xf32> -> vector<8x128xf32>
    %c0_17 = arith.constant 0 : index
    %c0_18 = arith.constant 0 : index
    %25 = vector.load %arg7[%c0_17, %c0_18] : memref<8x1xf32, #tpu.memory_space<vmem>>, vector<8x1xf32>
    %26 = vector.broadcast %25 : vector<8x1xf32> to vector<8x128xf32>
    %27 = arith.addf %24, %26 : vector<8x128xf32>
    %28 = vector.extract_strided_slice %27 {offsets = [0, 0], sizes = [4, 128], strides = [1, 1]} : vector<8x128xf32> to vector<4x128xf32>
    %29 = vector.extract_strided_slice %27 {offsets = [4, 0], sizes = [4, 128], strides = [1, 1]} : vector<8x128xf32> to vector<4x128xf32>
    %cst_19 = arith.constant 2.000000e+00 : f32
    %30 = vector.broadcast %cst_19 : f32 to vector<4x128xf32>
    %31 = arith.addf %28, %30 : vector<4x128xf32>
    %32 = arith.negf %31 : vector<4x128xf32>
    %33 = math.exp %32 : vector<4x128xf32>
    %cst_20 = arith.constant 1.000000e+00 : f32
    %34 = vector.broadcast %cst_20 : f32 to vector<4x128xf32>
    %35 = arith.addf %34, %33 : vector<4x128xf32>
    %36 = arith.divf %34, %35 : vector<4x128xf32>
    %37 = arith.addf %2, %29 : vector<4x128xf32>
    %38 = arith.mulf %37, %36 : vector<4x128xf32>
    %cst_21 = arith.constant 0.000000e+00 : f32
    %39 = vector.broadcast %cst_21 : f32 to vector<4x128xf32>
    %40 = arith.subf %39, %31 : vector<4x128xf32>
    %cst_22 = arith.constant 0.000000e+00 : f32
    %41 = vector.broadcast %cst_22 : f32 to vector<4x128xf32>
    %42 = arith.maximumf %40, %41 : vector<4x128xf32>
    %43 = vector.broadcast %cst_22 : f32 to vector<4x128xf32>
    %44 = arith.subf %40, %43 : vector<4x128xf32>
    %45 = arith.cmpf one, %44, %44 : vector<4x128xf32>
    %46 = vector.broadcast %cst_22 : f32 to vector<4x128xf32>
    %47 = arith.addf %40, %46 : vector<4x128xf32>
    %48 = math.absf %44 : vector<4x128xf32>
    %cst_23 = arith.constant 0.000000e+00 : f32
    %49 = vector.broadcast %cst_23 : f32 to vector<4x128xf32>
    %50 = arith.subf %49, %48 : vector<4x128xf32>
    %51 = math.exp %50 : vector<4x128xf32>
    %52 = math.log1p %51 : vector<4x128xf32>
    %53 = arith.addf %42, %52 : vector<4x128xf32>
    %54 = arith.select %45, %47, %53 : vector<4x128xi1>, vector<4x128xf32>
    %cst_24 = arith.constant 0.000000e+00 : f32
    %55 = vector.broadcast %cst_24 : f32 to vector<4x128xf32>
    %56 = arith.subf %55, %54 : vector<4x128xf32>
    %cst_25 = arith.constant dense<0.000000e+00> : vector<128xf32>
    %57 = vector.multi_reduction <add>, %56, %cst_25 [0] : vector<4x128xf32> to vector<128xf32>
    %58 = vector.shape_cast %57 : vector<128xf32> to vector<1x128xf32>
    %c0_26 = arith.constant 0 : index
    %c0_27 = arith.constant 0 : index
    %59 = vector.load %arg9[%c0_26, %c0_27] : memref<1x128xf32, #tpu.memory_space<vmem>>, vector<1x128xf32>
    tpu.vector_store %arg9[%c0_26, %c0_27], %58 {strides = array<i32>} : memref<1x128xf32, #tpu.memory_space<vmem>>, vector<1x128xf32>,
    %60 = tpu.concatenate %1, %38 in 0 : vector<4x128xf32>, vector<4x128xf32> -> vector<8x128xf32>
    %c0_28 = arith.constant 0 : index
    %c0_29 = arith.constant 0 : index
    %61 = vector.load %arg8[%c0_28, %c0_29] : memref<8x128xf32, #tpu.memory_space<vmem>>, vector<8x128xf32>
    tpu.vector_store %arg8[%c0_28, %c0_29], %60 {strides = array<i32>} : memref<8x128xf32, #tpu.memory_space<vmem>>, vector<8x128xf32>,
    return
  }
  func.func @transform_0(%arg0: i32) -> (i32, i32) {
    %c0_i32 = arith.constant 0 : i32
    %c0_i32_0 = arith.constant 0 : i32
    return %c0_i32, %arg0 : i32, i32
  }
  func.func @transform_1(%arg0: i32) -> (i32, i32) {
    %c0_i32 = arith.constant 0 : i32
    %c0_i32_0 = arith.constant 0 : i32
    %c0_i32_1 = arith.constant 0 : i32
    return %c0_i32, %c0_i32_0 : i32, i32
  }
  func.func @transform_2(%arg0: i32) -> (i32, i32) {
    %c0_i32 = arith.constant 0 : i32
    %c0_i32_0 = arith.constant 0 : i32
    %c0_i32_1 = arith.constant 0 : i32
    return %c0_i32, %c0_i32_0 : i32, i32
  }
  func.func @transform_3(%arg0: i32) -> (i32, i32) {
    %c0_i32 = arith.constant 0 : i32
    %c0_i32_0 = arith.constant 0 : i32
    %c0_i32_1 = arith.constant 0 : i32
    return %c0_i32, %c0_i32_0 : i32, i32
  }
  func.func @transform_4(%arg0: i32) -> (i32, i32) {
    %c0_i32 = arith.constant 0 : i32
    %c0_i32_0 = arith.constant 0 : i32
    %c0_i32_1 = arith.constant 0 : i32
    return %c0_i32, %c0_i32_0 : i32, i32
  }
  func.func @transform_5(%arg0: i32) -> (i32, i32) {
    %c0_i32 = arith.constant 0 : i32
    %c0_i32_0 = arith.constant 0 : i32
    %c0_i32_1 = arith.constant 0 : i32
    return %c0_i32, %c0_i32_0 : i32, i32
  }
  func.func @transform_6(%arg0: i32) -> (i32, i32) {
    %c0_i32 = arith.constant 0 : i32
    %c0_i32_0 = arith.constant 0 : i32
    %c0_i32_1 = arith.constant 0 : i32
    return %c0_i32, %c0_i32_0 : i32, i32
  }
  func.func @transform_7(%arg0: i32) -> (i32, i32) {
    %c0_i32 = arith.constant 0 : i32
    %c0_i32_0 = arith.constant 0 : i32
    return %c0_i32, %arg0 : i32, i32
  }
  func.func @transform_8(%arg0: i32) -> (i32, i32) {
    %c0_i32 = arith.constant 0 : i32
    %c0_i32_0 = arith.constant 0 : i32
    return %c0_i32, %arg0 : i32, i32
  }
}

</mosaic_0001>

<llo_original>
// kernel: tpu_custom_call.1
$region0: #{tpu_custom_call.1}
  #allocation0 [shape = 'u32[]', space=smem, size = 0x4, offset = 0x4, fixed_abs, tag = 'smem constant byte address 0x4 - core index']
  #allocation1 [shape = 'u32[144,128]{1,0:T(1,128)}', space=vmem, size = 0x12000, scoped, tag = 'internal scratch']
  %s0 = inlined_call_operand.vmem [shape: f32[8,256], index: 0, kind: input, shape index: {}]
  %s1 = inlined_call_operand.vmem [shape: f32[32,4], index: 1, kind: input, shape index: {}]
  %s2 = inlined_call_operand.vmem [shape: f32[32,1], index: 2, kind: input, shape index: {}]
  %s3 = inlined_call_operand.vmem [shape: f32[32,32], index: 3, kind: input, shape index: {}]
  %s4 = inlined_call_operand.vmem [shape: f32[32,1], index: 4, kind: input, shape index: {}]
  %s5 = inlined_call_operand.vmem [shape: f32[8,32], index: 5, kind: input, shape index: {}]
  %s6 = inlined_call_operand.vmem [shape: f32[8,1], index: 6, kind: input, shape index: {}]
  %s7 = inlined_call_operand.hbm [shape: f32[8,256], index: 7, kind: output, shape index: {0}]
  %s8 = inlined_call_operand.hbm [shape: f32[1,256], index: 8, kind: output, shape index: {1}]
  %9 = xla_tuple %s7, %s8
  %s10 = sld [smem:[#allocation0]]
  $region69: #{tpu_custom_call.1} parent=0
    _
  %s12 = ssub.s32 1, %s10
  %s13 = scalar_select 0, %s12, %s10
  $region1: #{tpu_custom_call.1} parent=0
    #allocation2 [shape = 'u8[8192]{0}', space=vmem, size = 0x2000, scoped, tag = 'output window, operand 0']
    #allocation3 [shape = 's32[2]{0}', space=sflag, size = 0x8, scoped, tag = 'scoped memory for tpu_custom_call.1']
    #allocation4 [shape = 'u8[1024]{0}', space=vmem, size = 0x400, scoped, tag = 'output window, operand 1']
    #allocation5 [shape = 's32[2]{0}', space=sflag, size = 0x8, scoped, tag = 'scoped memory for tpu_custom_call.1']
    %14 = vsyncpa [#allocation3], 0
    %s15 = scalar_lea.sflag [#allocation3], 1
    %16 = vsyncpa %s15, 0
    %17 = vsyncpa [#allocation5], 0
    %s18 = scalar_lea.sflag [#allocation5], 1
    %19 = vsyncpa %s18, 0
    loop: start=0, step=1, limit=4
    $region2: #{tpu_custom_call.1} parent=1 // loop_pre_header
      _
    $region3: #{tpu_custom_call.1} parent=1 // loop_header
      %s21 = sphi 0, %s25
      %p22 = scmp.ge.s32.totalorder %s21, 4
      %s31 = sphi 0, %s33
      %s34 = sphi 0, %s31
      %s35 = sphi 0, %s34
      %s51 = sphi 0, %s35
      %s55 = sphi 0, %s55
      %s57 = sphi 0, %s55
      %s58 = sphi 0, %s57
      %s72 = sphi 0, %s58
      %s76 = sphi 0, %s76
      %s78 = sphi 0, %s76
      %s79 = sphi 0, %s78
      %s93 = sphi 0, %s79
      %s97 = sphi 0, %s97
      %s99 = sphi 0, %s97
      %s100 = sphi 0, %s99
      %s114 = sphi 0, %s100
      %s118 = sphi 0, %s118
      %s120 = sphi 0, %s118
      %s121 = sphi 0, %s120
      %s135 = sphi 0, %s121
      %s139 = sphi 0, %s139
      %s141 = sphi 0, %s139
      %s142 = sphi 0, %s141
      %s156 = sphi 0, %s142
      %s160 = sphi 0, %s160
      %s162 = sphi 0, %s160
      %s163 = sphi 0, %s162
      %s177 = sphi 0, %s163
      %s183 = sphi 0, %s185
      %s186 = sphi 0, %s183
      %s187 = sphi 0, %s186
      %s203 = sphi 0, %s187
      %s209 = sphi 0, %s211
      %s212 = sphi 0, %s209
      %s213 = sphi 0, %s212
      %s229 = sphi 0, %s213
    $region4: #{tpu_custom_call.1} parent=1 // loop_header_branch
      %24 = sbr.rel (%p22) target = $region8
    $region5: #{tpu_custom_call.1} parent=1 // loop_body
      %s26 = ssub.s32 %s21, 1
      %s27 = ssub.s32 %s21, 2
      %s28 = sadd.s32 %s21, 1
      %s29 = ssub.s32 %s21, %s28
      %p30 = scmp.eq.s32.totalorder %s29, 0
      %s32 = sadd.s32 %s31, 1
      %s33 = scalar_select %p30, %s31, %s32
      %p36 = pneg %p30
      %p37 = scmp.eq.s32.totalorder %s21, 1
      %p38 = por %p36, %p37
      %p39 = scmp.ne.s32.totalorder %s31, %s34
      %p40 = scmp.eq.s32.totalorder %s21, 0
      %p41 = por %p39, %p40
      %p42 = scmp.ne.s32.totalorder %s31, %s34
      %p43 = scmp.eq.s32.totalorder %s26, 1
      %p44 = por %p42, %p43
      %p45 = scmp.ne.s32.totalorder %s34, %s35
      %p46 = scmp.eq.s32.totalorder %s26, 0
      %p47 = por %p45, %p46
      %p48 = scmp.ne.s32.totalorder %s34, %s35
      %p49 = scmp.eq.s32.totalorder %s27, 1
      %p50 = por %p48, %p49
      %p52 = scmp.ne.s32.totalorder %s35, %s51
      %p53 = scmp.eq.s32.totalorder %s27, 0
      %p54 = por %p52, %p53
      %s56 = sadd.s32 %s55, 1
      %p59 = scmp.eq.s32.totalorder %s21, 1
      %p60 = scmp.ne.s32.totalorder %s55, %s57
      %p61 = scmp.eq.s32.totalorder %s21, 0
      %p62 = por %p60, %p61
      %p63 = scmp.ne.s32.totalorder %s55, %s57
      %p64 = scmp.eq.s32.totalorder %s26, 1
      %p65 = por %p63, %p64
      %p66 = scmp.ne.s32.totalorder %s57, %s58
      %p67 = scmp.eq.s32.totalorder %s26, 0
      %p68 = por %p66, %p67
      %p69 = scmp.ne.s32.totalorder %s57, %s58
      %p70 = scmp.eq.s32.totalorder %s27, 1
      %p71 = por %p69, %p70
      %p73 = scmp.ne.s32.totalorder %s58, %s72
      %p74 = scmp.eq.s32.totalorder %s27, 0
      %p75 = por %p73, %p74
      %s77 = sadd.s32 %s76, 1
      %p80 = scmp.eq.s32.totalorder %s21, 1
      %p81 = scmp.ne.s32.totalorder %s76, %s78
      %p82 = scmp.eq.s32.totalorder %s21, 0
      %p83 = por %p81, %p82
      %p84 = scmp.ne.s32.totalorder %s76, %s78
      %p85 = scmp.eq.s32.totalorder %s26, 1
      %p86 = por %p84, %p85
      %p87 = scmp.ne.s32.totalorder %s78, %s79
      %p88 = scmp.eq.s32.totalorder %s26, 0
      %p89 = por %p87, %p88
      %p90 = scmp.ne.s32.totalorder %s78, %s79
      %p91 = scmp.eq.s32.totalorder %s27, 1
      %p92 = por %p90, %p91
      %p94 = scmp.ne.s32.totalorder %s79, %s93
      %p95 = scmp.eq.s32.totalorder %s27, 0
      %p96 = por %p94, %p95
      %s98 = sadd.s32 %s97, 1
      %p101 = scmp.eq.s32.totalorder %s21, 1
      %p102 = scmp.ne.s32.totalorder %s97, %s99
      %p103 = scmp.eq.s32.totalorder %s21, 0
      %p104 = por %p102, %p103
      %p105 = scmp.ne.s32.totalorder %s97, %s99
      %p106 = scmp.eq.s32.totalorder %s26, 1
      %p107 = por %p105, %p106
      %p108 = scmp.ne.s32.totalorder %s99, %s100
      %p109 = scmp.eq.s32.totalorder %s26, 0
      %p110 = por %p108, %p109
      %p111 = scmp.ne.s32.totalorder %s99, %s100
      %p112 = scmp.eq.s32.totalorder %s27, 1
      %p113 = por %p111, %p112
      %p115 = scmp.ne.s32.totalorder %s100, %s114
      %p116 = scmp.eq.s32.totalorder %s27, 0
      %p117 = por %p115, %p116
      %s119 = sadd.s32 %s118, 1
      %p122 = scmp.eq.s32.totalorder %s21, 1
      %p123 = scmp.ne.s32.totalorder %s118, %s120
      %p124 = scmp.eq.s32.totalorder %s21, 0
      %p125 = por %p123, %p124
      %p126 = scmp.ne.s32.totalorder %s118, %s120
      %p127 = scmp.eq.s32.totalorder %s26, 1
      %p128 = por %p126, %p127
      %p129 = scmp.ne.s32.totalorder %s120, %s121
      %p130 = scmp.eq.s32.totalorder %s26, 0
      %p131 = por %p129, %p130
      %p132 = scmp.ne.s32.totalorder %s120, %s121
      %p133 = scmp.eq.s32.totalorder %s27, 1
      %p134 = por %p132, %p133
      %p136 = scmp.ne.s32.totalorder %s121, %s135
      %p137 = scmp.eq.s32.totalorder %s27, 0
      %p138 = por %p136, %p137
      %s140 = sadd.s32 %s139, 1
      %p143 = scmp.eq.s32.totalorder %s21, 1
      %p144 = scmp.ne.s32.totalorder %s139, %s141
      %p145 = scmp.eq.s32.totalorder %s21, 0
      %p146 = por %p144, %p145
      %p147 = scmp.ne.s32.totalorder %s139, %s141
      %p148 = scmp.eq.s32.totalorder %s26, 1
      %p149 = por %p147, %p148
      %p150 = scmp.ne.s32.totalorder %s141, %s142
      %p151 = scmp.eq.s32.totalorder %s26, 0
      %p152 = por %p150, %p151
      %p153 = scmp.ne.s32.totalorder %s141, %s142
      %p154 = scmp.eq.s32.totalorder %s27, 1
      %p155 = por %p153, %p154
      %p157 = scmp.ne.s32.totalorder %s142, %s156
      %p158 = scmp.eq.s32.totalorder %s27, 0
      %p159 = por %p157, %p158
      %s161 = sadd.s32 %s160, 1
      %p164 = scmp.eq.s32.totalorder %s21, 1
      %p165 = scmp.ne.s32.totalorder %s160, %s162
      %p166 = scmp.eq.s32.totalorder %s21, 0
      %p167 = por %p165, %p166
      %p168 = scmp.ne.s32.totalorder %s160, %s162
      %p169 = scmp.eq.s32.totalorder %s26, 1
      %p170 = por %p168, %p169
      %p171 = scmp.ne.s32.totalorder %s162, %s163
      %p172 = scmp.eq.s32.totalorder %s26, 0
      %p173 = por %p171, %p172
      %p174 = scmp.ne.s32.totalorder %s162, %s163
      %p175 = scmp.eq.s32.totalorder %s27, 1
      %p176 = por %p174, %p175
      %p178 = scmp.ne.s32.totalorder %s163, %s177
      %p179 = scmp.eq.s32.totalorder %s27, 0
      %p180 = por %p178, %p179
      %s181 = ssub.s32 %s21, %s28
      %p182 = scmp.eq.s32.totalorder %s181, 0
      %s184 = sadd.s32 %s183, 1
      %s185 = scalar_select %p182, %s183, %s184
      %p188 = pneg %p182
      %p189 = scmp.eq.s32.totalorder %s21, 1
      %p190 = por %p188, %p189
      %p191 = scmp.ne.s32.totalorder %s183, %s186
      %p192 = scmp.eq.s32.totalorder %s21, 0
      %p193 = por %p191, %p192
      %p194 = scmp.ne.s32.totalorder %s183, %s186
      %p195 = scmp.eq.s32.totalorder %s26, 1
      %p196 = por %p194, %p195
      %p197 = scmp.ne.s32.totalorder %s186, %s187
      %p198 = scmp.eq.s32.totalorder %s26, 0
      %p199 = por %p197, %p198
      %p200 = scmp.ne.s32.totalorder %s186, %s187
      %p201 = scmp.eq.s32.totalorder %s27, 1
      %p202 = por %p200, %p201
      %p204 = scmp.ne.s32.totalorder %s187, %s203
      %p205 = scmp.eq.s32.totalorder %s27, 0
      %p206 = por %p204, %p205
      %s207 = ssub.s32 %s21, %s28
      %p208 = scmp.eq.s32.totalorder %s207, 0
      %s210 = sadd.s32 %s209, 1
      %s211 = scalar_select %p208, %s209, %s210
      %p214 = pneg %p208
      %p215 = scmp.eq.s32.totalorder %s21, 1
      %p216 = por %p214, %p215
      %p217 = scmp.ne.s32.totalorder %s209, %s212
      %p218 = scmp.eq.s32.totalorder %s21, 0
      %p219 = por %p217, %p218
      %p220 = scmp.ne.s32.totalorder %s209, %s212
      %p221 = scmp.eq.s32.totalorder %s26, 1
      %p222 = por %p220, %p221
      %p223 = scmp.ne.s32.totalorder %s212, %s213
      %p224 = scmp.eq.s32.totalorder %s26, 0
      %p225 = por %p223, %p224
      %p226 = scmp.ne.s32.totalorder %s212, %s213
      %p227 = scmp.eq.s32.totalorder %s27, 1
      %p228 = por %p226, %p227
      %p230 = scmp.ne.s32.totalorder %s213, %s229
      %p231 = scmp.eq.s32.totalorder %s27, 0
      %p232 = por %p230, %p231
      %p233 = scmp.le.s32.totalorder 1, %s21
      %p234 = scmp.lt.s32.totalorder %s21, 3
      %p235 = pnand %p233, %p234
      %p236 = pneg %p235
      // Predicated region
      $region9: #{tpu_custom_call.1} parent=5 // pred_check
        _
      $region10: #{tpu_custom_call.1} parent=5 // pred_check_branch
        %238 = sbr.rel (%p235) target = $region12
      $region11: #{tpu_custom_call.1} parent=5 // pred_region
        %s239 = ssub.s32 %s21, 1
        // Predicated region
        $region13: #{tpu_custom_call.1} parent=11 // pred_check
          %p240 = pneg %p68
        $region14: #{tpu_custom_call.1} parent=11 // pred_check_branch
          %242 = sbr.rel (%p240) target = $region16
        $region15: #{tpu_custom_call.1} parent=11 // pred_region
          _
        $region16: #{tpu_custom_call.1} parent=11 // pred_fallthru
          _
        // Predicated region
        $region17: #{tpu_custom_call.1} parent=11 // pred_check
          %p243 = pneg %p89
        $region18: #{tpu_custom_call.1} parent=11 // pred_check_branch
          %245 = sbr.rel (%p243) target = $region20
        $region19: #{tpu_custom_call.1} parent=11 // pred_region
          _
        $region20: #{tpu_custom_call.1} parent=11 // pred_fallthru
          _
        // Predicated region
        $region21: #{tpu_custom_call.1} parent=11 // pred_check
          %p246 = pneg %p110
        $region22: #{tpu_custom_call.1} parent=11 // pred_check_branch
          %248 = sbr.rel (%p246) target = $region24
        $region23: #{tpu_custom_call.1} parent=11 // pred_region
          _
        $region24: #{tpu_custom_call.1} parent=11 // pred_fallthru
          _
        // Predicated region
        $region25: #{tpu_custom_call.1} parent=11 // pred_check
          %p249 = pneg %p131
        $region26: #{tpu_custom_call.1} parent=11 // pred_check_branch
          %251 = sbr.rel (%p249) target = $region28
        $region27: #{tpu_custom_call.1} parent=11 // pred_region
          _
        $region28: #{tpu_custom_call.1} parent=11 // pred_fallthru
          _
        // Predicated region
        $region29: #{tpu_custom_call.1} parent=11 // pred_check
          %p252 = pneg %p152
        $region30: #{tpu_custom_call.1} parent=11 // pred_check_branch
          %254 = sbr.rel (%p252) target = $region32
        $region31: #{tpu_custom_call.1} parent=11 // pred_region
          _
        $region32: #{tpu_custom_call.1} parent=11 // pred_fallthru
          _
        // Predicated region
        $region33: #{tpu_custom_call.1} parent=11 // pred_check
          %p255 = pneg %p173
        $region34: #{tpu_custom_call.1} parent=11 // pred_check_branch
          %257 = sbr.rel (%p255) target = $region36
        $region35: #{tpu_custom_call.1} parent=11 // pred_region
          _
        $region36: #{tpu_custom_call.1} parent=11 // pred_fallthru
          _
      $region12: #{tpu_custom_call.1} parent=5 // pred_fallthru
        _
      %p258 = scmp.lt.s32.totalorder %s21, 2
      // Predicated region
      $region37: #{tpu_custom_call.1} parent=5 // pred_check
        %p259 = pneg %p258
      $region38: #{tpu_custom_call.1} parent=5 // pred_check_branch
        %261 = sbr.rel (%p259) target = $region40
      $region39: #{tpu_custom_call.1} parent=5 // pred_region
        // Predicated region
        $region41: #{tpu_custom_call.1} parent=39 // pred_check
          %p262 = pneg %p41
        $region42: #{tpu_custom_call.1} parent=39 // pred_check_branch
          %264 = sbr.rel (%p262) target = $region44
        $region43: #{tpu_custom_call.1} parent=39 // pred_region
          %p265 = scmp.lt.s32.totalorder %s21, 1
          %s266 = scalar_select %p265, %s21, 1
          %s267 = smul.addr %s266, 8
          %s268 = scalar_lea.vmem %s0, %s267
        $region44: #{tpu_custom_call.1} parent=39 // pred_fallthru
          _
      $region40: #{tpu_custom_call.1} parent=5 // pred_fallthru
        _
      %p269 = scmp.le.s32.totalorder 1, %s21
      %p270 = scmp.lt.s32.totalorder %s21, 3
      %p271 = pnand %p269, %p270
      %p272 = pneg %p271
      // Predicated region
      $region45: #{tpu_custom_call.1} parent=5 // pred_check
        _
      $region46: #{tpu_custom_call.1} parent=5 // pred_check_branch
        %274 = sbr.rel (%p271) target = $region48
      $region47: #{tpu_custom_call.1} parent=5 // pred_region
        %s275 = ssub.s32 %s21, 1
        %p276 = scmp.lt.s32.totalorder %s26, 1
        %s277 = scalar_select %p276, %s26, 1
        %s278 = smul.addr %s277, 8
        %s279 = scalar_lea.vmem %s0, %s278
        %p280 = pneg %p47
        %p281 = pneg %p44
        %p282 = pneg %p68
        %p283 = pneg %p65
        %p284 = pneg %p89
        %p285 = pneg %p86
        %p286 = pneg %p110
        %p287 = pneg %p107
        %p288 = pneg %p131
        %p289 = pneg %p128
        %p290 = pneg %p152
        %p291 = pneg %p149
        %p292 = pneg %p173
        %p293 = pneg %p170
        %p294 = pneg %p199
        %p295 = pneg %p196
        %s296 = sand.u32 %s186, 1
        %s297 = scalar_lea.sflag [#allocation3], %s296
        %s298 = sand.u32 %s186, 1
        %s299 = smul.addr %s298, 8
        %s300 = scalar_lea.vmem [#allocation2], %s299
        %p301 = pneg %p225
        %p302 = pneg %p222
        %s303 = sand.u32 %s212, 1
        %s304 = scalar_lea.sflag [#allocation5], %s303
        %s305 = sand.u32 %s212, 1
        %s306 = scalar_lea.vmem [#allocation4], %s305
        %p307 = scmp.lt.s32.totalorder %s26, 1
        %s308 = scalar_select %p307, %s26, 1
        %s309 = smul.addr %s308, 8
        %s310 = scalar_lea.vmem %s0, %s309
        %v311 = vld [vmem:[%s310] sm:$0xff]
        %v312 = vld [vmem:[%s1] sm:$0xff]
        %v313 = vld [vmem:[%s1 + $0x8] sm:$0xff]
        %v314 = vld [vmem:[%s1 + $0x10] sm:$0xff]
        %v315 = vld [vmem:[%s1 + $0x18] sm:$0xff]
        %v316 = vld [vmem:[%s2] sm:$0xff]
        %v317 = vld [vmem:[%s2 + $0x8] sm:$0xff]
        %v318 = vld [vmem:[%s2 + $0x10] sm:$0xff]
        %v319 = vld [vmem:[%s2 + $0x18] sm:$0xff]
        %321 = vset.pattern.permute.xlu0 0
        %322 = vperm.xlu0 %321, %v316
        %v323 = vpop.permute.xlu0 %322
        %326 = vset.pattern.permute.xlu0 0
        %327 = vperm.xlu0 %326, %v317
        %v328 = vpop.permute.xlu0 %327
        %331 = vset.pattern.permute.xlu0 0
        %332 = vperm.xlu0 %331, %v318
        %v333 = vpop.permute.xlu0 %332
        %336 = vset.pattern.permute.xlu0 0
        %337 = vperm.xlu0 %336, %v319
        %v338 = vpop.permute.xlu0 %337
        %vm340 = vcmask 31744
        %v342 = vsel %vm340, %v312, 0
        %v345 = vsel %vm340, %v313, 0
        %v348 = vsel %vm340, %v314, 0
        %v351 = vsel %vm340, %v315, 0
        %vm353 = vcmask 1043456
        %v355 = vsel %vm353, %v311, 0
        %357 = vmatprep.subr.mxu0 0.0
        %358 = vmatpush1.msra.mxu0 %v355
        %359 = vmatprep.subr.mxu0 0.0
        %360 = vmatpush1.msra.mxu0 0.0
        %361 = vmatprep.subr.mxu0 0.0
        %362 = vmatpush1.msra.mxu0 0.0
        %363 = vmatprep.subr.mxu0 0.0
        %364 = vmatpush1.msra.mxu0 0.0
        %365 = vmatprep.subr.mxu0 0.0
        %366 = vmatpush1.msra.mxu0 0.0
        %367 = vmatprep.subr.mxu0 0.0
        %368 = vmatpush1.msra.mxu0 0.0
        %369 = vmatprep.subr.mxu0 0.0
        %370 = vmatpush1.msra.mxu0 0.0
        %371 = vmatprep.subr.mxu0 0.0
        %372 = vmatpush1.msra.mxu0 0.0
        %373 = vmatprep.subr.mxu0 0.0
        %374 = vmatpush1.msra.mxu0 0.0
        %375 = vmatprep.subr.mxu0 0.0
        %376 = vmatpush1.msra.mxu0 0.0
        %377 = vmatprep.subr.mxu0 0.0
        %378 = vmatpush1.msra.mxu0 0.0
        %379 = vmatprep.subr.mxu0 0.0
        %380 = vmatpush1.msra.mxu0 0.0
        %381 = vmatprep.subr.mxu0 0.0
        %382 = vmatpush1.msra.mxu0 0.0
        %383 = vmatprep.subr.mxu0 0.0
        %384 = vmatpush1.msra.mxu0 0.0
        %385 = vmatprep.subr.mxu0 0.0
        %386 = vmatpush1.msra.mxu0 0.0
        %387 = vmatprep.subr.mxu0 0.0
        %388 = vmatpush1.msra.mxu0 0.0
        %389 = vmatprep.subr.mxu0 0.0
        %390 = vmatpush1.msra.mxu0 0.0
        %391 = vmatprep.subr.mxu0 0.0
        %392 = vmatpush1.msra.mxu0 0.0
        %393 = vmatprep.subr.mxu0 0.0
        %394 = vmatpush1.msra.mxu0 0.0
        %395 = vmatprep.subr.mxu0 0.0
        %396 = vmatpush1.msra.mxu0 0.0
        %397 = vmatprep.subr.mxu0 0.0
        %398 = vmatpush1.msra.mxu0 0.0
        %399 = vmatprep.subr.mxu0 0.0
        %400 = vmatpush1.msra.mxu0 0.0
        %401 = vmatprep.subr.mxu0 0.0
        %402 = vmatpush1.msra.mxu0 0.0
        %403 = vmatprep.subr.mxu0 0.0
        %404 = vmatpush1.msra.mxu0 0.0
        %405 = vmatprep.subr.mxu0 0.0
        %406 = vmatpush1.msra.mxu0 0.0
        %407 = vmatprep.subr.mxu0 0.0
        %408 = vmatpush1.msra.mxu0 0.0
        %409 = vmatprep.subr.mxu0 0.0
        %410 = vmatpush1.msra.mxu0 0.0
        %411 = vmatprep.subr.mxu0 0.0
        %412 = vmatpush1.msra.mxu0 0.0
        %413 = vmatprep.subr.mxu0 0.0
        %414 = vmatpush1.msra.mxu0 0.0
        %415 = vmatprep.subr.mxu0 0.0
        %416 = vmatpush1.msra.mxu0 0.0
        %417 = vmatprep.subr.mxu0 0.0
        %418 = vmatpush1.msra.mxu0 0.0
        %419 = vmatprep.subr.mxu0 0.0
        %420 = vmatpush1.msra.mxu0 0.0
        %421 = vmatprep.mubr.f32.mxu0 0.0
        %422 = vmatmul.mubr.f32.gmra.mrb[0].mxu0 %v342
        %v423 = vpop.f32.mrb[0].mxu0
        %v424 = vadd.f32 %v323, %v423
        %v425 = vpop.f32.mrb[0].mxu0
        %426 = vmatprep.mubr.f32.mxu0 0.0
        %427 = vmatmul.mubr.f32.gmra.mrb[0].mxu0 %v345
        %v428 = vpop.f32.mrb[0].mxu0
        %v429 = vadd.f32 %v328, %v428
        %v430 = vpop.f32.mrb[0].mxu0
        %431 = vmatprep.mubr.f32.mxu0 0.0
        %432 = vmatmul.mubr.f32.gmra.mrb[0].mxu0 %v348
        %v433 = vpop.f32.mrb[0].mxu0
        %v434 = vadd.f32 %v333, %v433
        %v435 = vpop.f32.mrb[0].mxu0
        %436 = vmatprep.mubr.f32.mxu0 0.0
        %437 = vmatmul.mubr.f32.gmra.mrb[0].mxu0 %v351
        %v438 = vpop.f32.mrb[0].mxu0
        %v439 = vadd.f32 %v338, %v438
        %v440 = vpop.f32.mrb[0].mxu0
        %441 = vdwg.mxu0
        %vm442 = vcmp.gt.f32.partialorder %v424, 0.0
        %vm443 = vcmp.gt.f32.partialorder %v429, 0.0
        %vm444 = vcmp.gt.f32.partialorder %v434, 0.0
        %vm445 = vcmp.gt.f32.partialorder %v439, 0.0
        %v446 = vmul.f32 %v424, 0.01
        %v447 = vmul.f32 %v429, 0.01
        %v448 = vmul.f32 %v434, 0.01
        %v449 = vmul.f32 %v439, 0.01
        %v450 = vsel %vm442, %v424, %v446
        %v451 = vsel %vm443, %v429, %v447
        %v452 = vsel %vm444, %v434, %v448
        %v453 = vsel %vm445, %v439, %v449
        %v454 = vld [vmem:[%s3] sm:$0xff]
        %v455 = vld [vmem:[%s3 + $0x8] sm:$0xff]
        %v456 = vld [vmem:[%s3 + $0x10] sm:$0xff]
        %v457 = vld [vmem:[%s3 + $0x18] sm:$0xff]
        %v458 = vld [vmem:[%s4] sm:$0xff]
        %v459 = vld [vmem:[%s4 + $0x8] sm:$0xff]
        %v460 = vld [vmem:[%s4 + $0x10] sm:$0xff]
        %v461 = vld [vmem:[%s4 + $0x18] sm:$0xff]
        %463 = vset.pattern.permute.xlu0 0
        %464 = vperm.xlu0 %463, %v458
        %v465 = vpop.permute.xlu0 %464
        %468 = vset.pattern.permute.xlu0 0
        %469 = vperm.xlu0 %468, %v459
        %v470 = vpop.permute.xlu0 %469
        %473 = vset.pattern.permute.xlu0 0
        %474 = vperm.xlu0 %473, %v460
        %v475 = vpop.permute.xlu0 %474
        %478 = vset.pattern.permute.xlu0 0
        %479 = vperm.xlu0 %478, %v461
        %v480 = vpop.permute.xlu0 %479
        %vm482 = vcmask 261120
        %v484 = vsel %vm482, %v454, 0
        %v487 = vsel %vm482, %v455, 0
        %v490 = vsel %vm482, %v456, 0
        %v493 = vsel %vm482, %v457, 0
        %495 = vmatprep.subr.mxu0 0.0
        %496 = vmatpush1.msra.mxu0 %v450
        %497 = vmatprep.subr.mxu0 0.0
        %498 = vmatpush1.msra.mxu0 %v451
        %499 = vmatprep.subr.mxu0 0.0
        %500 = vmatpush1.msra.mxu0 %v452
        %501 = vmatprep.subr.mxu0 0.0
        %502 = vmatpush1.msra.mxu0 %v453
        %503 = vmatprep.subr.mxu0 0.0
        %504 = vmatpush1.msra.mxu0 0.0
        %505 = vmatprep.subr.mxu0 0.0
        %506 = vmatpush1.msra.mxu0 0.0
        %507 = vmatprep.subr.mxu0 0.0
        %508 = vmatpush1.msra.mxu0 0.0
        %509 = vmatprep.subr.mxu0 0.0
        %510 = vmatpush1.msra.mxu0 0.0
        %511 = vmatprep.subr.mxu0 0.0
        %512 = vmatpush1.msra.mxu0 0.0
        %513 = vmatprep.subr.mxu0 0.0
        %514 = vmatpush1.msra.mxu0 0.0
        %515 = vmatprep.subr.mxu0 0.0
        %516 = vmatpush1.msra.mxu0 0.0
        %517 = vmatprep.subr.mxu0 0.0
        %518 = vmatpush1.msra.mxu0 0.0
        %519 = vmatprep.subr.mxu0 0.0
        %520 = vmatpush1.msra.mxu0 0.0
        %521 = vmatprep.subr.mxu0 0.0
        %522 = vmatpush1.msra.mxu0 0.0
        %523 = vmatprep.subr.mxu0 0.0
        %524 = vmatpush1.msra.mxu0 0.0
        %525 = vmatprep.subr.mxu0 0.0
        %526 = vmatpush1.msra.mxu0 0.0
        %527 = vmatprep.subr.mxu0 0.0
        %528 = vmatpush1.msra.mxu0 0.0
        %529 = vmatprep.subr.mxu0 0.0
        %530 = vmatpush1.msra.mxu0 0.0
        %531 = vmatprep.subr.mxu0 0.0
        %532 = vmatpush1.msra.mxu0 0.0
        %533 = vmatprep.subr.mxu0 0.0
        %534 = vmatpush1.msra.mxu0 0.0
        %535 = vmatprep.subr.mxu0 0.0
        %536 = vmatpush1.msra.mxu0 0.0
        %537 = vmatprep.subr.mxu0 0.0
        %538 = vmatpush1.msra.mxu0 0.0
        %539 = vmatprep.subr.mxu0 0.0
        %540 = vmatpush1.msra.mxu0 0.0
        %541 = vmatprep.subr.mxu0 0.0
        %542 = vmatpush1.msra.mxu0 0.0
        %543 = vmatprep.subr.mxu0 0.0
        %544 = vmatpush1.msra.mxu0 0.0
        %545 = vmatprep.subr.mxu0 0.0
        %546 = vmatpush1.msra.mxu0 0.0
        %547 = vmatprep.subr.mxu0 0.0
        %548 = vmatpush1.msra.mxu0 0.0
        %549 = vmatprep.subr.mxu0 0.0
        %550 = vmatpush1.msra.mxu0 0.0
        %551 = vmatprep.subr.mxu0 0.0
        %552 = vmatpush1.msra.mxu0 0.0
        %553 = vmatprep.subr.mxu0 0.0
        %554 = vmatpush1.msra.mxu0 0.0
        %555 = vmatprep.subr.mxu0 0.0
        %556 = vmatpush1.msra.mxu0 0.0
        %557 = vmatprep.subr.mxu0 0.0
        %558 = vmatpush1.msra.mxu0 0.0
        %559 = vmatprep.mubr.f32.mxu0 0.0
        %560 = vmatmul.mubr.f32.gmra.mrb[0].mxu0 %v484
        %v561 = vpop.f32.mrb[0].mxu0
        %v562 = vadd.f32 %v465, %v561
        %v563 = vpop.f32.mrb[0].mxu0
        %564 = vmatprep.mubr.f32.mxu0 0.0
        %565 = vmatmul.mubr.f32.gmra.mrb[0].mxu0 %v487
        %v566 = vpop.f32.mrb[0].mxu0
        %v567 = vadd.f32 %v470, %v566
        %v568 = vpop.f32.mrb[0].mxu0
        %569 = vmatprep.mubr.f32.mxu0 0.0
        %570 = vmatmul.mubr.f32.gmra.mrb[0].mxu0 %v490
        %v571 = vpop.f32.mrb[0].mxu0
        %v572 = vadd.f32 %v475, %v571
        %v573 = vpop.f32.mrb[0].mxu0
        %574 = vmatprep.mubr.f32.mxu0 0.0
        %575 = vmatmul.mubr.f32.gmra.mrb[0].mxu0 %v493
        %v576 = vpop.f32.mrb[0].mxu0
        %v577 = vadd.f32 %v480, %v576
        %v578 = vpop.f32.mrb[0].mxu0
        %579 = vdwg.mxu0
        %vm580 = vcmp.gt.f32.partialorder %v562, 0.0
        %vm581 = vcmp.gt.f32.partialorder %v567, 0.0
        %vm582 = vcmp.gt.f32.partialorder %v572, 0.0
        %vm583 = vcmp.gt.f32.partialorder %v577, 0.0
        %v584 = vmul.f32 %v562, 0.01
        %v585 = vmul.f32 %v567, 0.01
        %v586 = vmul.f32 %v572, 0.01
        %v587 = vmul.f32 %v577, 0.01
        %v588 = vsel %vm580, %v562, %v584
        %v589 = vsel %vm581, %v567, %v585
        %v590 = vsel %vm582, %v572, %v586
        %v591 = vsel %vm583, %v577, %v587
        %v592 = vld [vmem:[%s5] sm:$0xff]
        %v593 = vld [vmem:[%s6] sm:$0xff]
        %595 = vset.pattern.permute.xlu0 0
        %596 = vperm.xlu0 %595, %v593
        %v597 = vpop.permute.xlu0 %596
        %v600 = vsel %vm482, %v592, 0
        %602 = vmatprep.subr.mxu0 0.0
        %603 = vmatpush1.msra.mxu0 %v588
        %604 = vmatprep.subr.mxu0 0.0
        %605 = vmatpush1.msra.mxu0 %v589
        %606 = vmatprep.subr.mxu0 0.0
        %607 = vmatpush1.msra.mxu0 %v590
        %608 = vmatprep.subr.mxu0 0.0
        %609 = vmatpush1.msra.mxu0 %v591
        %610 = vmatprep.subr.mxu0 0.0
        %611 = vmatpush1.msra.mxu0 0.0
        %612 = vmatprep.subr.mxu0 0.0
        %613 = vmatpush1.msra.mxu0 0.0
        %614 = vmatprep.subr.mxu0 0.0
        %615 = vmatpush1.msra.mxu0 0.0
        %616 = vmatprep.subr.mxu0 0.0
        %617 = vmatpush1.msra.mxu0 0.0
        %618 = vmatprep.subr.mxu0 0.0
        %619 = vmatpush1.msra.mxu0 0.0
        %620 = vmatprep.subr.mxu0 0.0
        %621 = vmatpush1.msra.mxu0 0.0
        %622 = vmatprep.subr.mxu0 0.0
        %623 = vmatpush1.msra.mxu0 0.0
        %624 = vmatprep.subr.mxu0 0.0
        %625 = vmatpush1.msra.mxu0 0.0
        %626 = vmatprep.subr.mxu0 0.0
        %627 = vmatpush1.msra.mxu0 0.0
        %628 = vmatprep.subr.mxu0 0.0
        %629 = vmatpush1.msra.mxu0 0.0
        %630 = vmatprep.subr.mxu0 0.0
        %631 = vmatpush1.msra.mxu0 0.0
        %632 = vmatprep.subr.mxu0 0.0
        %633 = vmatpush1.msra.mxu0 0.0
        %634 = vmatprep.subr.mxu0 0.0
        %635 = vmatpush1.msra.mxu0 0.0
        %636 = vmatprep.subr.mxu0 0.0
        %637 = vmatpush1.msra.mxu0 0.0
        %638 = vmatprep.subr.mxu0 0.0
        %639 = vmatpush1.msra.mxu0 0.0
        %640 = vmatprep.subr.mxu0 0.0
        %641 = vmatpush1.msra.mxu0 0.0
        %642 = vmatprep.subr.mxu0 0.0
        %643 = vmatpush1.msra.mxu0 0.0
        %644 = vmatprep.subr.mxu0 0.0
        %645 = vmatpush1.msra.mxu0 0.0
        %646 = vmatprep.subr.mxu0 0.0
        %647 = vmatpush1.msra.mxu0 0.0
        %648 = vmatprep.subr.mxu0 0.0
        %649 = vmatpush1.msra.mxu0 0.0
        %650 = vmatprep.subr.mxu0 0.0
        %651 = vmatpush1.msra.mxu0 0.0
        %652 = vmatprep.subr.mxu0 0.0
        %653 = vmatpush1.msra.mxu0 0.0
        %654 = vmatprep.subr.mxu0 0.0
        %655 = vmatpush1.msra.mxu0 0.0
        %656 = vmatprep.subr.mxu0 0.0
        %657 = vmatpush1.msra.mxu0 0.0
        %658 = vmatprep.subr.mxu0 0.0
        %659 = vmatpush1.msra.mxu0 0.0
        %660 = vmatprep.subr.mxu0 0.0
        %661 = vmatpush1.msra.mxu0 0.0
        %662 = vmatprep.subr.mxu0 0.0
        %663 = vmatpush1.msra.mxu0 0.0
        %664 = vmatprep.subr.mxu0 0.0
        %665 = vmatpush1.msra.mxu0 0.0
        %666 = vmatprep.mubr.f32.mxu0 0.0
        %667 = vmatmul.mubr.f32.gmra.mrb[0].mxu0 %v600
        %v668 = vpop.f32.mrb[0].mxu0
        %v669 = vadd.f32 %v597, %v668
        %v670 = vpop.f32.mrb[0].mxu0
        %671 = vdwg.mxu0
        %v672 = vadd.f32 %v669, 2.0
        %v673 = vxor.u32 %v672, 2147483648
        %v674 = vmul.f32 %v673, 1.442695
        %v675 = vpow.pop %v674
        %v676 = vadd.f32 %v675, 1.0
        %v677 = vrcp.pop %v676
        %v678 = vmul.f32 1.0, %v677
        %v679 = vadd.f32 %v311, %v669
        %v681 = vrot.slane %v678, 4
        %v683 = vmul.f32 %v679, %v681
        %v684 = vsub.f32 0.0, %v672
        %v685 = vmax.f32 %v684, 0.0
        %vm686 = vcmp.ne.f32.partialorder %v684, %v684
        %v687 = vadd.f32 %v684, 0.0
        %v688 = vand.u32 2147483647, %v684
        %v689 = vsub.f32 0.0, %v688
        %v690 = vmul.f32 %v689, 1.442695
        %v691 = vpow.pop %v690
        %v692 = vadd.f32 %v691, 1.0
        %v693 = vlog2.pop %v692
        %v694 = vmul.f32 %v693, 0.6931472
        %v695 = vmul.f32 -0.5, %v691
        %v696 = vadd.f32 %v695, 1.0
        %v697 = vmul.f32 %v696, %v691
        %v698 = vand.u32 2147483647, %v691
        %vm699 = vcmp.lt.f32.partialorder %v698, 0.0004427343
        %v700 = vsel %vm699, %v697, %v694
        %v701 = vadd.f32 %v685, %v700
        %v702 = vsel %vm686, %v687, %v701
        %v703 = vsub.f32 0.0, %v702
        %v704 = vsel %vm353, %v703, 0.0
        %v705 = vrot.slane %v704, 4
        %v706 = vadd.f32 %v704, %v705
        %v707 = vrot.slane %v706, 2
        %v708 = vadd.f32 %v706, %v707
        %v709 = vrot.slane %v708, 1
        %v710 = vadd.f32 %v708, %v709
        %711 = vst [vmem:[%s306] sm:$0x1] %v710
        %v712 = vsel %vm353, %v311, %v683
        %713 = vst [vmem:[%s300] sm:$0xff] %v712
        %s714 = sand.u32 %s186, 1
        %s715 = scalar_lea.sflag [#allocation3], %s714
        %s716 = sand.u32 %s186, 1
        %s717 = smul.addr %s716, 8
        %s718 = scalar_lea.vmem [#allocation2], %s717
        %s719 = sand.u32 %s212, 1
        %s720 = scalar_lea.sflag [#allocation5], %s719
        %s721 = sand.u32 %s212, 1
        %s722 = scalar_lea.vmem [#allocation4], %s721
        // Predicated region
        $region49: #{tpu_custom_call.1} parent=47 // pred_check
          %p723 = pneg %p196
        $region50: #{tpu_custom_call.1} parent=47 // pred_check_branch
          %725 = sbr.rel (%p723) target = $region52
        $region51: #{tpu_custom_call.1} parent=47 // pred_region
          %s727 = ssub.s32 128, 128
          %728 = vsyncadd %s715, %s727
          %s729 = smul.addr %s26, 128
          %s730 = scalar_lea.hbm %s7, %s729
          %s732 = sshll.u32 %s718, 4
          %s733 = int_to_ptr.vmem [resolvable:$true] %s732
          %735 = dma.vmem_to_hbm [thread:$0]  %s733, 128, %s730, %s715
        $region52: #{tpu_custom_call.1} parent=47 // pred_fallthru
          _
        // Predicated region
        $region53: #{tpu_custom_call.1} parent=47 // pred_check
          %p736 = pneg %p222
        $region54: #{tpu_custom_call.1} parent=47 // pred_check_branch
          %738 = sbr.rel (%p736) target = $region56
        $region55: #{tpu_custom_call.1} parent=47 // pred_region
          %s740 = ssub.s32 16, 16
          %741 = vsyncadd %s720, %s740
          %s742 = smul.addr %s26, 16
          %s743 = scalar_lea.hbm %s8, %s742
          %s745 = sshll.u32 %s722, 4
          %s746 = int_to_ptr.vmem [resolvable:$true] %s745
          %748 = dma.vmem_to_hbm [thread:$0]  %s746, 16, %s743, %s720
        $region56: #{tpu_custom_call.1} parent=47 // pred_fallthru
          _
      $region48: #{tpu_custom_call.1} parent=5 // pred_fallthru
        _
      %p749 = scmp.le.s32.totalorder 2, %s21
      // Predicated region
      $region57: #{tpu_custom_call.1} parent=5 // pred_check
        %p750 = pneg %p749
      $region58: #{tpu_custom_call.1} parent=5 // pred_check_branch
        %752 = sbr.rel (%p750) target = $region60
      $region59: #{tpu_custom_call.1} parent=5 // pred_region
        %s753 = ssub.s32 %s21, 2
        // Predicated region
        $region61: #{tpu_custom_call.1} parent=59 // pred_check
          %p754 = pneg %p202
        $region62: #{tpu_custom_call.1} parent=59 // pred_check_branch
          %756 = sbr.rel (%p754) target = $region64
        $region63: #{tpu_custom_call.1} parent=59 // pred_region
          %s757 = sand.u32 %s187, 1
          %s758 = scalar_lea.sflag [#allocation3], %s757
          %s759 = sand.u32 %s187, 1
          %s760 = smul.addr %s759, 8
          %s761 = scalar_lea.vmem [#allocation2], %s760
          %762 = dma.done %s758, 128
        $region64: #{tpu_custom_call.1} parent=59 // pred_fallthru
          _
        // Predicated region
        $region65: #{tpu_custom_call.1} parent=59 // pred_check
          %p763 = pneg %p228
        $region66: #{tpu_custom_call.1} parent=59 // pred_check_branch
          %765 = sbr.rel (%p763) target = $region68
        $region67: #{tpu_custom_call.1} parent=59 // pred_region
          %s766 = sand.u32 %s213, 1
          %s767 = scalar_lea.sflag [#allocation5], %s766
          %s768 = sand.u32 %s213, 1
          %s769 = scalar_lea.vmem [#allocation4], %s768
          %770 = dma.done %s767, 16
        $region68: #{tpu_custom_call.1} parent=59 // pred_fallthru
          _
      $region60: #{tpu_custom_call.1} parent=5 // pred_fallthru
        _
    $region6: #{tpu_custom_call.1} parent=1 // loop_footer
      %s25 = sadd.s32 1, %s21
    $region7: #{tpu_custom_call.1} parent=1 // loop_footer_branch
      %20 = sbr.rel target = $region3
    $region8: #{tpu_custom_call.1} parent=1 // loop_exit
      _
    %771 = vsyncpa [#allocation3], 1
    %s772 = scalar_lea.sflag [#allocation3], 1
    %773 = vsyncpa %s772, 1
    %774 = vsyncpa [#allocation5], 1
    %s775 = scalar_lea.sflag [#allocation5], 1
    %776 = vsyncpa %s775, 1

</llo_original>
